<compile_context>
chip_gen: v6e
topology: v6e:2x2x1
jax: 0.10.0
libtpu: 0.0.40
codegen_flags: <defaults>
</compile_context>

<pallas_src>
import jax
import jax.numpy as jnp
from jax.experimental import pallas as pl
from jax.experimental.pallas import tpu as pltpu

BN_EPS = 1e-5


def _round_up(x, m):
    return ((x + m - 1) // m) * m


def mlp_kernel(x_ref, w1_ref, b1_ref, w2_ref, b2_ref, w3_ref, b3_ref, o_ref):
    # Layer 1 (BN0 folded into w1/b1) + ReLU.
    h = (jnp.dot(x_ref[...], w1_ref[...], preferred_element_type=jnp.float32)
         + b1_ref[...])
    h = jnp.maximum(h, 0.0)

    # Layer 2 (BN1 folded into w2/b2) + ReLU.
    h = (jnp.dot(h.astype(w2_ref.dtype), w2_ref[...],
                 preferred_element_type=jnp.float32) + b2_ref[...])
    h = jnp.maximum(h, 0.0)

    # Layer 3 (BN2 folded into w3/b3); stored unpadded (out_dim columns).
    o_ref[...] = (jnp.dot(h.astype(w3_ref.dtype), w3_ref[...],
                          preferred_element_type=jnp.float32)
                  + b3_ref[...]).astype(o_ref.dtype)


def init_params(key, emb_dims, cont_dim, output_size):
    """Deterministic kaiming-normal init matching the module's shapes."""
    n_emb = sum(size for _, size in emb_dims)
    d_in = n_emb + cont_dim

    keys = jax.random.split(key, len(emb_dims) + 3)

    # nn.Embedding(cat, size), kaiming_normal_ -> std = sqrt(2/size)
    emb_tables = []
    for k, (cat, size) in zip(keys[:len(emb_dims)], emb_dims):
        std = (2.0 / size) ** 0.5
        emb_tables.append(std * jax.random.normal(k, (cat, size), jnp.float32))

    def linear(k, fan_in, fan_out):
        std = (2.0 / fan_in) ** 0.5  # kaiming_normal_, mode=fan_in
        w = std * jax.random.normal(k, (fan_in, fan_out), jnp.float32)
        b = jnp.zeros((fan_out,), jnp.float32)
        return w, b

    w1, b1 = linear(keys[-3], d_in, 64)
    w2, b2 = linear(keys[-2], 64, 32)
    w3, b3 = linear(keys[-1], 32, output_size)

    def bn_fold(n):
        # PyTorch defaults: gamma=1, beta=0, running_mean=0, running_var=1
        gamma = jnp.ones((n,), jnp.float32)
        beta = jnp.zeros((n,), jnp.float32)
        mean = jnp.zeros((n,), jnp.float32)
        var = jnp.ones((n,), jnp.float32)
        scale = gamma / jnp.sqrt(var + BN_EPS)
        shift = beta - mean * scale
        return scale, shift

    return dict(emb_tables=emb_tables,
                bn0=bn_fold(cont_dim),   # BatchNorm1d(cont_dim)
                w1=w1, b1=b1, bn1=bn_fold(64),
                w2=w2, b2=b2, bn2=bn_fold(32),
                w3=w3, b3=b3,
                n_emb=n_emb, d_in=d_in, output_size=output_size)


def _fold_params(params):
    """Fold the three eval-mode BatchNorm affines into adjacent Linears."""
    n_emb = params["n_emb"]
    bn0_s, bn0_t = params["bn0"]
    bn1_s, bn1_t = params["bn1"]
    bn2_s, bn2_t = params["bn2"]

    w1 = params["w1"]
    # BN0 acts on the cont slice of the layer-1 input: scale its weight rows,
    # push its shift into the bias. Embedding rows are untouched.
    w1f = jnp.concatenate([w1[:n_emb], bn0_s[:, None] * w1[n_emb:]], axis=0)
    b1f = params["b1"] + bn0_t @ w1[n_emb:]

    w2f = bn1_s[:, None] * params["w2"]            # BN1 folded
    b2f = params["b2"] + bn1_t @ params["w2"]

    w3f = bn2_s[:, None] * params["w3"]            # BN2 folded
    b3f = params["b3"] + bn2_t @ params["w3"]
    return w1f, b1f, w2f, b2f, w3f, b3f


def categorical_embedding_forward(x_cont, x_emb, params, *,
                                  tile_b=2048, use_bf16=False):
    # --- glue: embedding gather + concat stay in JAX (tables are tiny,
    #     data-dependent row gather); the kernel sees one merged (B, d_in)
    #     activation stream.
    emb_cols = [tbl[x_emb[:, i]] for i, tbl in enumerate(params["emb_tables"])]
    x = jnp.concatenate(emb_cols + [x_cont.astype(jnp.float32)], axis=1)

    B, d_in = x.shape
    out_dim = params["output_size"]

    w1, b1, w2, b2, w3, b3 = _fold_params(params)

    # --- batch tiling: large sublane-aligned tiles, few grid steps.
    tb = min(tile_b, _round_up(B, 8))
    b_pad = _round_up(B, tb)
    if b_pad // tb == 1 and B >= 512:
        # Keep >= 2 grid steps so ("parallel",) can shard the batch across
        # both v7x TensorCores instead of collapsing to one step.
        tb = _round_up((B + 1) // 2, 8)
        b_pad = _round_up(B, tb)
    if b_pad != B:
        x = jnp.pad(x, ((0, b_pad - B), (0, 0)))

    act_dtype = jnp.bfloat16 if use_bf16 else jnp.float32
    x = x.astype(act_dtype)
    w1 = w1.astype(act_dtype)
    w2 = w2.astype(act_dtype)
    w3 = w3.astype(act_dtype)
    # biases stay f32 — added to f32 MXU accumulators
    b1, b2, b3 = b1[None, :], b2[None, :], b3[None, :]

    row_map = lambda i: (i, 0)       # batch-tiled stream
    const_map = lambda i: (0, 0)     # weights/biases stay VMEM-resident

    out = pl.pallas_call(
        mlp_kernel,
        out_shape=jax.ShapeDtypeStruct((b_pad, out_dim), jnp.float32),
        grid=(b_pad // tb,),
        in_specs=[
            pl.BlockSpec((tb, d_in), row_map),
            pl.BlockSpec(w1.shape, const_map),
            pl.BlockSpec(b1.shape, const_map),
            pl.BlockSpec(w2.shape, const_map),
            pl.BlockSpec(b2.shape, const_map),
            pl.BlockSpec(w3.shape, const_map),
            pl.BlockSpec(b3.shape, const_map),
        ],
        out_specs=pl.BlockSpec((tb, out_dim), row_map),
        compiler_params=pltpu.CompilerParams(
            dimension_semantics=("parallel",),      # shard batch across TCs
            vmem_limit_bytes=32 * 1024 * 1024),     # safe on v5e/v6e/v7x
    )(x, w1, b1, w2, b2, w3, b3)

    return out[:B]


def reference_forward(x_cont, x_emb, params):
    """Plain-JAX eval-mode reference (original, un-folded math)."""
    emb = jnp.concatenate([params["emb_tables"][i][x_emb[:, i]]
                           for i in range(len(params["emb_tables"]))], axis=1)
    bn0_s, bn0_t = params["bn0"]
    x = jnp.concatenate([emb, x_cont * bn0_s + bn0_t], axis=1)
    h = jnp.maximum(x @ params["w1"] + params["b1"], 0.0)
    h = h * params["bn1"][0] + params["bn1"][1]
    h = jnp.maximum(h @ params["w2"] + params["b2"], 0.0)
    h = h * params["bn2"][0] + params["bn2"][1]
    return h @ params["w3"] + params["b3"]


if __name__ == "__main__":
    key = jax.random.PRNGKey(0)

    emb_dims = [(10, 4), (7, 3), (5, 2)]   # (num_categories, emb_size)
    cont_dim = 5
    output_size = 2

    k_param, k_data = jax.random.split(key)
    params = init_params(k_param, emb_dims, cont_dim, output_size)

    def make_inputs(k, batch):
        k_cont, *k_idx = jax.random.split(k, 1 + len(emb_dims))
        xc = jax.random.normal(k_cont, (batch, cont_dim), jnp.float32)
        xe = jnp.stack(
            [jax.random.randint(kk, (batch,), 0, cat, dtype=jnp.int32)
             for kk, (cat, _) in zip(k_idx, emb_dims)], axis=1)
        return xc, xe

    keys = jax.random.split(k_data, 3)

    # 1) small batch, single tile, f32 — exact check
    x_cont, x_emb = make_inputs(keys[0], 8)
    out = categorical_embedding_forward(x_cont, x_emb, params)
    jax.block_until_ready(out)
    assert out.shape == (8, output_size)
    assert jnp.allclose(out, reference_forward(x_cont, x_emb, params),
                        atol=1e-4, rtol=1e-4)

    # 2) multi-step grid with batch padding, f32
    x_cont, x_emb = make_inputs(keys[1], 200)
    out = categorical_embedding_forward(x_cont, x_emb, params, tile_b=64)
    jax.block_until_ready(out)
    assert out.shape == (200, output_size)
    assert jnp.allclose(out, reference_forward(x_cont, x_emb, params),
                        atol=1e-4, rtol=1e-4)

    # 3) two-tile megacore split path + bf16 activations/weights
    x_cont, x_emb = make_inputs(keys[2], 520)
    out = categorical_embedding_forward(x_cont, x_emb, params, use_bf16=True)
    jax.block_until_ready(out)
    assert out.shape == (520, output_size)
    assert jnp.allclose(out, reference_forward(x_cont, x_emb, params),
                        atol=1e-1, rtol=5e-2)

    print("KERNEL_OK")
</pallas_src>

<mosaic_0001>
module attributes {stable_mosaic.version = 11 : i64} {
  func.func @mlp_kernel(%arg0: i32, %arg1: memref<8x14xf32, #tpu.memory_space<vmem>>, %arg2: memref<14x64xf32, #tpu.memory_space<vmem>>, %arg3: memref<1x64xf32, #tpu.memory_space<vmem>>, %arg4: memref<64x32xf32, #tpu.memory_space<vmem>>, %arg5: memref<1x32xf32, #tpu.memory_space<vmem>>, %arg6: memref<32x2xf32, #tpu.memory_space<vmem>>, %arg7: memref<1x2xf32, #tpu.memory_space<vmem>>, %arg8: memref<8x2xf32, #tpu.memory_space<vmem>>) attributes {dimension_semantics = [#tpu.dimension_semantics<parallel>], iteration_bounds = array<i64: 1>, scalar_prefetch = 0 : i64, scratch_operands = 0 : i64, tpu.core_type = #tpu.core_type<tc>, window_params = [{transform_indices = @transform_0, window_bounds = array<i64: 8, 14>}, {pipeline_mode = #tpu.pipeline_mode<synchronous>, transform_indices = @transform_1, window_bounds = array<i64: 14, 64>}, {pipeline_mode = #tpu.pipeline_mode<synchronous>, transform_indices = @transform_2, window_bounds = array<i64: 1, 64>}, {pipeline_mode = #tpu.pipeline_mode<synchronous>, transform_indices = @transform_3, window_bounds = array<i64: 64, 32>}, {pipeline_mode = #tpu.pipeline_mode<synchronous>, transform_indices = @transform_4, window_bounds = array<i64: 1, 32>}, {pipeline_mode = #tpu.pipeline_mode<synchronous>, transform_indices = @transform_5, window_bounds = array<i64: 32, 2>}, {pipeline_mode = #tpu.pipeline_mode<synchronous>, transform_indices = @transform_6, window_bounds = array<i64: 1, 2>}, {transform_indices = @transform_7, window_bounds = array<i64: 8, 2>}]} {
    %c0 = arith.constant 0 : index
    %c0_0 = arith.constant 0 : index
    %0 = vector.load %arg1[%c0, %c0_0] : memref<8x14xf32, #tpu.memory_space<vmem>>, vector<8x14xf32>
    %c0_1 = arith.constant 0 : index
    %c0_2 = arith.constant 0 : index
    %1 = vector.load %arg2[%c0_1, %c0_2] : memref<14x64xf32, #tpu.memory_space<vmem>>, vector<14x64xf32>
    %cst = arith.constant dense<0.000000e+00> : vector<8x64xf32>
    %2 = tpu.matmul %0, %1, %cst {dimension_numbers = #tpu.dot_dimension_numbers<[1], [0], [0], [1], [0, 0, 1, 1], [], []>} : vector<8x14xf32>, vector<14x64xf32>, vector<8x64xf32> -> vector<8x64xf32>
    %c0_3 = arith.constant 0 : index
    %c0_4 = arith.constant 0 : index
    %3 = vector.load %arg3[%c0_3, %c0_4] : memref<1x64xf32, #tpu.memory_space<vmem>>, vector<1x64xf32>
    %4 = vector.broadcast %3 : vector<1x64xf32> to vector<8x64xf32>
    %5 = arith.addf %2, %4 : vector<8x64xf32>
    %cst_5 = arith.constant 0.000000e+00 : f32
    %6 = vector.broadcast %cst_5 : f32 to vector<8x64xf32>
    %7 = arith.maximumf %5, %6 : vector<8x64xf32>
    %c0_6 = arith.constant 0 : index
    %c0_7 = arith.constant 0 : index
    %8 = vector.load %arg4[%c0_6, %c0_7] : memref<64x32xf32, #tpu.memory_space<vmem>>, vector<64x32xf32>
    %cst_8 = arith.constant dense<0.000000e+00> : vector<8x32xf32>
    %9 = tpu.matmul %7, %8, %cst_8 {dimension_numbers = #tpu.dot_dimension_numbers<[1], [0], [0], [1], [0, 0, 1, 1], [], []>} : vector<8x64xf32>, vector<64x32xf32>, vector<8x32xf32> -> vector<8x32xf32>
    %c0_9 = arith.constant 0 : index
    %c0_10 = arith.constant 0 : index
    %10 = vector.load %arg5[%c0_9, %c0_10] : memref<1x32xf32, #tpu.memory_space<vmem>>, vector<1x32xf32>
    %11 = vector.broadcast %10 : vector<1x32xf32> to vector<8x32xf32>
    %12 = arith.addf %9, %11 : vector<8x32xf32>
    %cst_11 = arith.constant 0.000000e+00 : f32
    %13 = vector.broadcast %cst_11 : f32 to vector<8x32xf32>
    %14 = arith.maximumf %12, %13 : vector<8x32xf32>
    %c0_12 = arith.constant 0 : index
    %c0_13 = arith.constant 0 : index
    %15 = vector.load %arg6[%c0_12, %c0_13] : memref<32x2xf32, #tpu.memory_space<vmem>>, vector<32x2xf32>
    %cst_14 = arith.constant dense<0.000000e+00> : vector<8x2xf32>
    %16 = tpu.matmul %14, %15, %cst_14 {dimension_numbers = #tpu.dot_dimension_numbers<[1], [0], [0], [1], [0, 0, 1, 1], [], []>} : vector<8x32xf32>, vector<32x2xf32>, vector<8x2xf32> -> vector<8x2xf32>
    %c0_15 = arith.constant 0 : index
    %c0_16 = arith.constant 0 : index
    %17 = vector.load %arg7[%c0_15, %c0_16] : memref<1x2xf32, #tpu.memory_space<vmem>>, vector<1x2xf32>
    %18 = vector.broadcast %17 : vector<1x2xf32> to vector<8x2xf32>
    %19 = arith.addf %16, %18 : vector<8x2xf32>
    %c0_17 = arith.constant 0 : index
    %c0_18 = arith.constant 0 : index
    %20 = vector.load %arg8[%c0_17, %c0_18] : memref<8x2xf32, #tpu.memory_space<vmem>>, vector<8x2xf32>
    tpu.vector_store %arg8[%c0_17, %c0_18], %19 {strides = array<i32>} : memref<8x2xf32, #tpu.memory_space<vmem>>, vector<8x2xf32>,
    return
  }
  func.func @transform_0(%arg0: i32) -> (i32, i32) {
    %c0_i32 = arith.constant 0 : i32
    %c0_i32_0 = arith.constant 0 : i32
    return %arg0, %c0_i32 : i32, i32
  }
  func.func @transform_1(%arg0: i32) -> (i32, i32) {
    %c0_i32 = arith.constant 0 : i32
    %c0_i32_0 = arith.constant 0 : i32
    %c0_i32_1 = arith.constant 0 : i32
    return %c0_i32, %c0_i32_0 : i32, i32
  }
  func.func @transform_2(%arg0: i32) -> (i32, i32) {
    %c0_i32 = arith.constant 0 : i32
    %c0_i32_0 = arith.constant 0 : i32
    %c0_i32_1 = arith.constant 0 : i32
    return %c0_i32, %c0_i32_0 : i32, i32
  }
  func.func @transform_3(%arg0: i32) -> (i32, i32) {
    %c0_i32 = arith.constant 0 : i32
    %c0_i32_0 = arith.constant 0 : i32
    %c0_i32_1 = arith.constant 0 : i32
    return %c0_i32, %c0_i32_0 : i32, i32
  }
  func.func @transform_4(%arg0: i32) -> (i32, i32) {
    %c0_i32 = arith.constant 0 : i32
    %c0_i32_0 = arith.constant 0 : i32
    %c0_i32_1 = arith.constant 0 : i32
    return %c0_i32, %c0_i32_0 : i32, i32
  }
  func.func @transform_5(%arg0: i32) -> (i32, i32) {
    %c0_i32 = arith.constant 0 : i32
    %c0_i32_0 = arith.constant 0 : i32
    %c0_i32_1 = arith.constant 0 : i32
    return %c0_i32, %c0_i32_0 : i32, i32
  }
  func.func @transform_6(%arg0: i32) -> (i32, i32) {
    %c0_i32 = arith.constant 0 : i32
    %c0_i32_0 = arith.constant 0 : i32
    %c0_i32_1 = arith.constant 0 : i32
    return %c0_i32, %c0_i32_0 : i32, i32
  }
  func.func @transform_7(%arg0: i32) -> (i32, i32) {
    %c0_i32 = arith.constant 0 : i32
    %c0_i32_0 = arith.constant 0 : i32
    return %arg0, %c0_i32 : i32, i32
  }
}

</mosaic_0001>

<llo_original>
// kernel: tpu_custom_call.1
$region0: #{tpu_custom_call.1}
  #allocation0 [shape = 'u32[]', space=smem, size = 0x4, offset = 0x4, fixed_abs, tag = 'smem constant byte address 0x4 - core index']
  #allocation1 [shape = 'u32[144,128]{1,0:T(1,128)}', space=vmem, size = 0x12000, scoped, tag = 'internal scratch']
  %s0 = inlined_call_operand.vmem [shape: f32[8,14], index: 0, kind: input, shape index: {}]
  %s1 = inlined_call_operand.vmem [shape: f32[14,64], index: 1, kind: input, shape index: {}]
  %s2 = inlined_call_operand.vmem [shape: f32[1,64], index: 2, kind: input, shape index: {}]
  %s3 = inlined_call_operand.vmem [shape: f32[64,32], index: 3, kind: input, shape index: {}]
  %s4 = inlined_call_operand.vmem [shape: f32[1,32], index: 4, kind: input, shape index: {}]
  %s5 = inlined_call_operand.vmem [shape: f32[32,2], index: 5, kind: input, shape index: {}]
  %s6 = inlined_call_operand.vmem [shape: f32[1,2], index: 6, kind: input, shape index: {}]
  %s7 = inlined_call_operand.vmem [shape: f32[8,2], index: 7, kind: output, shape index: {}]
  %s8 = sld [smem:[#allocation0]]
  $region38: #{tpu_custom_call.1} parent=0
    _
  %s10 = ssub.s32 1, %s8
  %s11 = scalar_select 0, %s10, %s8
  // Predicated region
  $region2: #{tpu_custom_call.1} parent=0 // pred_check
    _
  $region3: #{tpu_custom_call.1} parent=0 // pred_check_branch
    %13 = sbr.rel (0) target = $region5
  $region4: #{tpu_custom_call.1} parent=0 // pred_region
    _
  $region5: #{tpu_custom_call.1} parent=0 // pred_fallthru
    _
  // Predicated region
  $region6: #{tpu_custom_call.1} parent=0 // pred_check
    _
  $region7: #{tpu_custom_call.1} parent=0 // pred_check_branch
    %15 = sbr.rel (0) target = $region9
  $region8: #{tpu_custom_call.1} parent=0 // pred_region
    _
  $region9: #{tpu_custom_call.1} parent=0 // pred_fallthru
    _
  // Predicated region
  $region10: #{tpu_custom_call.1} parent=0 // pred_check
    _
  $region11: #{tpu_custom_call.1} parent=0 // pred_check_branch
    %17 = sbr.rel (0) target = $region13
  $region12: #{tpu_custom_call.1} parent=0 // pred_region
    _
  $region13: #{tpu_custom_call.1} parent=0 // pred_fallthru
    _
  // Predicated region
  $region14: #{tpu_custom_call.1} parent=0 // pred_check
    _
  $region15: #{tpu_custom_call.1} parent=0 // pred_check_branch
    %19 = sbr.rel (0) target = $region17
  $region16: #{tpu_custom_call.1} parent=0 // pred_region
    _
  $region17: #{tpu_custom_call.1} parent=0 // pred_fallthru
    _
  // Predicated region
  $region18: #{tpu_custom_call.1} parent=0 // pred_check
    _
  $region19: #{tpu_custom_call.1} parent=0 // pred_check_branch
    %21 = sbr.rel (0) target = $region21
  $region20: #{tpu_custom_call.1} parent=0 // pred_region
    _
  $region21: #{tpu_custom_call.1} parent=0 // pred_fallthru
    _
  // Predicated region
  $region22: #{tpu_custom_call.1} parent=0 // pred_check
    _
  $region23: #{tpu_custom_call.1} parent=0 // pred_check_branch
    %23 = sbr.rel (0) target = $region25
  $region24: #{tpu_custom_call.1} parent=0 // pred_region
    _
  $region25: #{tpu_custom_call.1} parent=0 // pred_fallthru
    _
  // Predicated region
  $region26: #{tpu_custom_call.1} parent=0 // pred_check
    _
  $region27: #{tpu_custom_call.1} parent=0 // pred_check_branch
    %25 = sbr.rel (0) target = $region29
  $region28: #{tpu_custom_call.1} parent=0 // pred_region
    _
  $region29: #{tpu_custom_call.1} parent=0 // pred_fallthru
    _
  %v26 = vld [vmem:[%s0] sm:$0xff]
  %v27 = vld [vmem:[%s1] sm:$0xff]
  %v28 = vld [vmem:[%s1 + $0x8] sm:$0x3f]
  %v29 = vld [vmem:[%s2] sm:$0x1]
  %v31 = vlaneseq
  %v32 = vshrl.u32 %v31, 7
  %v33 = vsub.s32 0, %v32
  %v34 = vrot.slane %v29, %v33
  %vm36 = vcmask 113664
  %v38 = vsel %vm36, %v26, 0
  %vm40 = vcmask 1045504
  %v42 = vsel %vm40, %v28, 0
  %44 = vmatprep.subr.mxu0 0.0
  %45 = vmatpush1.msra.mxu0 0.0
  %46 = vmatprep.subr.mxu0 0.0
  %47 = vmatpush1.msra.mxu0 0.0
  %48 = vmatprep.subr.mxu0 0.0
  %49 = vmatpush1.msra.mxu0 0.0
  %50 = vmatprep.subr.mxu0 0.0
  %51 = vmatpush1.msra.mxu0 0.0
  %52 = vmatprep.subr.mxu0 0.0
  %53 = vmatpush1.msra.mxu0 0.0
  %54 = vmatprep.subr.mxu0 0.0
  %55 = vmatpush1.msra.mxu0 0.0
  %56 = vmatprep.subr.mxu0 0.0
  %57 = vmatpush1.msra.mxu0 0.0
  %58 = vmatprep.subr.mxu0 0.0
  %59 = vmatpush1.msra.mxu0 0.0
  %60 = vmatprep.subr.mxu0 0.0
  %61 = vmatpush1.msra.mxu0 0.0
  %62 = vmatprep.subr.mxu0 0.0
  %63 = vmatpush1.msra.mxu0 0.0
  %64 = vmatprep.subr.mxu0 0.0
  %65 = vmatpush1.msra.mxu0 0.0
  %66 = vmatprep.subr.mxu0 0.0
  %67 = vmatpush1.msra.mxu0 0.0
  %68 = vmatprep.subr.mxu0 0.0
  %69 = vmatpush1.msra.mxu0 0.0
  %70 = vmatprep.subr.mxu0 0.0
  %71 = vmatpush1.msra.mxu0 0.0
  %72 = vmatprep.subr.mxu0 0.0
  %73 = vmatpush1.msra.mxu0 %v42
  %74 = vmatprep.subr.mxu0 0.0
  %75 = vmatpush1.msra.mxu0 %v27
  %76 = vmatprep.subr.mxu0 0.0
  %77 = vmatpush2.msra.mxu0 0.0
  %78 = vmatprep.subr.mxu0 0.0
  %79 = vmatpush2.msra.mxu0 0.0
  %80 = vmatprep.subr.mxu0 0.0
  %81 = vmatpush2.msra.mxu0 0.0
  %82 = vmatprep.subr.mxu0 0.0
  %83 = vmatpush2.msra.mxu0 0.0
  %84 = vmatprep.subr.mxu0 0.0
  %85 = vmatpush2.msra.mxu0 0.0
  %86 = vmatprep.subr.mxu0 0.0
  %87 = vmatpush2.msra.mxu0 0.0
  %88 = vmatprep.subr.mxu0 0.0
  %89 = vmatpush2.msra.mxu0 0.0
  %90 = vmatprep.subr.mxu0 0.0
  %91 = vmatpush2.msra.mxu0 0.0
  %92 = vmatprep.subr.mxu0 0.0
  %93 = vmatpush2.msra.mxu0 0.0
  %94 = vmatprep.subr.mxu0 0.0
  %95 = vmatpush2.msra.mxu0 0.0
  %96 = vmatprep.subr.mxu0 0.0
  %97 = vmatpush2.msra.mxu0 0.0
  %98 = vmatprep.subr.mxu0 0.0
  %99 = vmatpush2.msra.mxu0 0.0
  %100 = vmatprep.subr.mxu0 0.0
  %101 = vmatpush2.msra.mxu0 0.0
  %102 = vmatprep.subr.mxu0 0.0
  %103 = vmatpush2.msra.mxu0 0.0
  %104 = vmatprep.subr.mxu0 0.0
  %105 = vmatpush2.msra.mxu0 0.0
  %106 = vmatprep.subr.mxu0 0.0
  %107 = vmatpush2.msra.mxu0 0.0
  %108 = vmatprep.mubr.f32.mxu0 0.0
  %109 = vmatmul.mubr.f32.gmra.mxu0 %v38
  %v110 = vpop.f32.mrf.mxu0
  %v111 = vadd.f32 %v34, %v110
  %v112 = vpop.f32.mrf.mxu0
  %113 = vdwg.mxu0
  %v114 = vmax.f32 %v111, 0.0
  %v115 = vld [vmem:[%s3] sm:$0xff]
  %v116 = vld [vmem:[%s3 + $0x8] sm:$0xff]
  %v117 = vld [vmem:[%s3 + $0x10] sm:$0xff]
  %v118 = vld [vmem:[%s3 + $0x18] sm:$0xff]
  %v119 = vld [vmem:[%s3 + $0x20] sm:$0xff]
  %v120 = vld [vmem:[%s3 + $0x28] sm:$0xff]
  %v121 = vld [vmem:[%s3 + $0x30] sm:$0xff]
  %v122 = vld [vmem:[%s3 + $0x38] sm:$0xff]
  %v123 = vld [vmem:[%s4] sm:$0x1]
  %v125 = vlaneseq
  %v126 = vshrl.u32 %v125, 7
  %v127 = vsub.s32 0, %v126
  %v128 = vrot.slane %v123, %v127
  %vm130 = vcmask 523264
  %v132 = vsel %vm130, %v114, 0
  %134 = vmatprep.subr.mxu0 0.0
  %135 = vmatpush1.msra.mxu0 0.0
  %136 = vmatprep.subr.mxu0 0.0
  %137 = vmatpush1.msra.mxu0 0.0
  %138 = vmatprep.subr.mxu0 0.0
  %139 = vmatpush1.msra.mxu0 0.0
  %140 = vmatprep.subr.mxu0 0.0
  %141 = vmatpush1.msra.mxu0 0.0
  %142 = vmatprep.subr.mxu0 0.0
  %143 = vmatpush1.msra.mxu0 0.0
  %144 = vmatprep.subr.mxu0 0.0
  %145 = vmatpush1.msra.mxu0 0.0
  %146 = vmatprep.subr.mxu0 0.0
  %147 = vmatpush1.msra.mxu0 0.0
  %148 = vmatprep.subr.mxu0 0.0
  %149 = vmatpush1.msra.mxu0 0.0
  %150 = vmatprep.subr.mxu0 0.0
  %151 = vmatpush1.msra.mxu0 %v122
  %152 = vmatprep.subr.mxu0 0.0
  %153 = vmatpush1.msra.mxu0 %v121
  %154 = vmatprep.subr.mxu0 0.0
  %155 = vmatpush1.msra.mxu0 %v120
  %156 = vmatprep.subr.mxu0 0.0
  %157 = vmatpush1.msra.mxu0 %v119
  %158 = vmatprep.subr.mxu0 0.0
  %159 = vmatpush1.msra.mxu0 %v118
  %160 = vmatprep.subr.mxu0 0.0
  %161 = vmatpush1.msra.mxu0 %v117
  %162 = vmatprep.subr.mxu0 0.0
  %163 = vmatpush1.msra.mxu0 %v116
  %164 = vmatprep.subr.mxu0 0.0
  %165 = vmatpush1.msra.mxu0 %v115
  %166 = vmatprep.subr.mxu0 0.0
  %167 = vmatpush2.msra.mxu0 0.0
  %168 = vmatprep.subr.mxu0 0.0
  %169 = vmatpush2.msra.mxu0 0.0
  %170 = vmatprep.subr.mxu0 0.0
  %171 = vmatpush2.msra.mxu0 0.0
  %172 = vmatprep.subr.mxu0 0.0
  %173 = vmatpush2.msra.mxu0 0.0
  %174 = vmatprep.subr.mxu0 0.0
  %175 = vmatpush2.msra.mxu0 0.0
  %176 = vmatprep.subr.mxu0 0.0
  %177 = vmatpush2.msra.mxu0 0.0
  %178 = vmatprep.subr.mxu0 0.0
  %179 = vmatpush2.msra.mxu0 0.0
  %180 = vmatprep.subr.mxu0 0.0
  %181 = vmatpush2.msra.mxu0 0.0
  %182 = vmatprep.subr.mxu0 0.0
  %183 = vmatpush2.msra.mxu0 0.0
  %184 = vmatprep.subr.mxu0 0.0
  %185 = vmatpush2.msra.mxu0 0.0
  %186 = vmatprep.subr.mxu0 0.0
  %187 = vmatpush2.msra.mxu0 0.0
  %188 = vmatprep.subr.mxu0 0.0
  %189 = vmatpush2.msra.mxu0 0.0
  %190 = vmatprep.subr.mxu0 0.0
  %191 = vmatpush2.msra.mxu0 0.0
  %192 = vmatprep.subr.mxu0 0.0
  %193 = vmatpush2.msra.mxu0 0.0
  %194 = vmatprep.subr.mxu0 0.0
  %195 = vmatpush2.msra.mxu0 0.0
  %196 = vmatprep.subr.mxu0 0.0
  %197 = vmatpush2.msra.mxu0 0.0
  %198 = vmatprep.mubr.f32.mxu0 0.0
  %199 = vmatmul.mubr.f32.gmra.mxu0 %v132
  %v200 = vpop.f32.mrf.mxu0
  %v201 = vadd.f32 %v128, %v200
  %v202 = vpop.f32.mrf.mxu0
  %203 = vdwg.mxu0
  %v204 = vmax.f32 %v201, 0.0
  %v205 = vld [vmem:[%s5] sm:$0xff]
  %v206 = vld [vmem:[%s5 + $0x8] sm:$0xff]
  %v207 = vld [vmem:[%s5 + $0x10] sm:$0xff]
  %v208 = vld [vmem:[%s5 + $0x18] sm:$0xff]
  %v209 = vld [vmem:[%s6] sm:$0x1]
  %v211 = vlaneseq
  %v212 = vshrl.u32 %v211, 7
  %v213 = vsub.s32 0, %v212
  %v214 = vrot.slane %v209, %v213
  %vm216 = vcmask 261120
  %v218 = vsel %vm216, %v204, 0
  %220 = vmatprep.subr.mxu0 0.0
  %221 = vmatpush1.msra.mxu0 0.0
  %222 = vmatprep.subr.mxu0 0.0
  %223 = vmatpush1.msra.mxu0 0.0
  %224 = vmatprep.subr.mxu0 0.0
  %225 = vmatpush1.msra.mxu0 0.0
  %226 = vmatprep.subr.mxu0 0.0
  %227 = vmatpush1.msra.mxu0 0.0
  %228 = vmatprep.subr.mxu0 0.0
  %229 = vmatpush1.msra.mxu0 0.0
  %230 = vmatprep.subr.mxu0 0.0
  %231 = vmatpush1.msra.mxu0 0.0
  %232 = vmatprep.subr.mxu0 0.0
  %233 = vmatpush1.msra.mxu0 0.0
  %234 = vmatprep.subr.mxu0 0.0
  %235 = vmatpush1.msra.mxu0 0.0
  %236 = vmatprep.subr.mxu0 0.0
  %237 = vmatpush1.msra.mxu0 0.0
  %238 = vmatprep.subr.mxu0 0.0
  %239 = vmatpush1.msra.mxu0 0.0
  %240 = vmatprep.subr.mxu0 0.0
  %241 = vmatpush1.msra.mxu0 0.0
  %242 = vmatprep.subr.mxu0 0.0
  %243 = vmatpush1.msra.mxu0 0.0
  %244 = vmatprep.subr.mxu0 0.0
  %245 = vmatpush1.msra.mxu0 %v208
  %246 = vmatprep.subr.mxu0 0.0
  %247 = vmatpush1.msra.mxu0 %v207
  %248 = vmatprep.subr.mxu0 0.0
  %249 = vmatpush1.msra.mxu0 %v206
  %250 = vmatprep.subr.mxu0 0.0
  %251 = vmatpush1.msra.mxu0 %v205
  %252 = vmatprep.subr.mxu0 0.0
  %253 = vmatpush2.msra.mxu0 0.0
  %254 = vmatprep.subr.mxu0 0.0
  %255 = vmatpush2.msra.mxu0 0.0
  %256 = vmatprep.subr.mxu0 0.0
  %257 = vmatpush2.msra.mxu0 0.0
  %258 = vmatprep.subr.mxu0 0.0
  %259 = vmatpush2.msra.mxu0 0.0
  %260 = vmatprep.subr.mxu0 0.0
  %261 = vmatpush2.msra.mxu0 0.0
  %262 = vmatprep.subr.mxu0 0.0
  %263 = vmatpush2.msra.mxu0 0.0
  %264 = vmatprep.subr.mxu0 0.0
  %265 = vmatpush2.msra.mxu0 0.0
  %266 = vmatprep.subr.mxu0 0.0
  %267 = vmatpush2.msra.mxu0 0.0
  %268 = vmatprep.subr.mxu0 0.0
  %269 = vmatpush2.msra.mxu0 0.0
  %270 = vmatprep.subr.mxu0 0.0
  %271 = vmatpush2.msra.mxu0 0.0
  %272 = vmatprep.subr.mxu0 0.0
  %273 = vmatpush2.msra.mxu0 0.0
  %274 = vmatprep.subr.mxu0 0.0
  %275 = vmatpush2.msra.mxu0 0.0
  %276 = vmatprep.subr.mxu0 0.0
  %277 = vmatpush2.msra.mxu0 0.0
  %278 = vmatprep.subr.mxu0 0.0
  %279 = vmatpush2.msra.mxu0 0.0
  %280 = vmatprep.subr.mxu0 0.0
  %281 = vmatpush2.msra.mxu0 0.0
  %282 = vmatprep.subr.mxu0 0.0
  %283 = vmatpush2.msra.mxu0 0.0
  %284 = vmatprep.mubr.f32.mxu0 0.0
  %285 = vmatmul.mubr.f32.gmra.mxu0 %v218
  %v286 = vpop.f32.mrf.mxu0
  %v287 = vadd.f32 %v214, %v286
  %v288 = vpop.f32.mrf.mxu0
  %289 = vdwg.mxu0
  %vm290 = vcmask 15360
  %291 = vst.msk [vmem:[%s7] sm:$0xff] %vm290, %v287
  // Predicated region
  $region30: #{tpu_custom_call.1} parent=0 // pred_check
    _
  $region31: #{tpu_custom_call.1} parent=0 // pred_check_branch
    %293 = sbr.rel (0) target = $region33
  $region32: #{tpu_custom_call.1} parent=0 // pred_region
    _
  $region33: #{tpu_custom_call.1} parent=0 // pred_fallthru
    _
  // Predicated region
  $region34: #{tpu_custom_call.1} parent=0 // pred_check
    _
  $region35: #{tpu_custom_call.1} parent=0 // pred_check_branch
    %295 = sbr.rel (0) target = $region37
  $region36: #{tpu_custom_call.1} parent=0 // pred_region
    _
  $region37: #{tpu_custom_call.1} parent=0 // pred_fallthru
    _

</llo_original>
